<compile_context>
chip_gen: v7x
topology: tpu7x:2x2x1
jax: 0.10.0
libtpu: 0.0.40
codegen_flags: <defaults>
</compile_context>

<pallas_src>
import functools

import jax
import jax.numpy as jnp
from jax import lax
from jax.experimental import pallas as pl
from jax.experimental.pallas import tpu as pltpu


# ----------------------------- Pallas kernel -------------------------------

def _ffn_kernel(x_ref, w_ref, b_ref, res_ref, gamma_ref, beta_ref, o_ref,
                acc_ref, *, eps, d_real):
    # x:     (tm, tk)       tile of hidden_states rows (matmul dtype)
    # w:     (tk, Doutp)    tile of W^T (pre-transposed in the wrapper)
    # b:     (1, Doutp)     bias (zero-padded)
    # res:   (tm, Doutp)    tile of input_tensor rows (residual)
    # gamma/beta: (1, Doutp) LayerNorm affine params (zero-padded)
    # acc:   (tm, Doutp)    f32 accumulator scratch (resident across k)
    k = pl.program_id(1)

    @pl.when(k == 0)
    def _():
        acc_ref[...] = jnp.zeros_like(acc_ref)

    # dense: x @ W^T, contracting dim is sublane-major on both operands ->
    # straight MXU push, f32 accumulation.
    acc_ref[...] += jnp.dot(x_ref[...], w_ref[...],
                            preferred_element_type=jnp.float32)

    @pl.when(k == pl.num_programs(1) - 1)
    def _():
        h = acc_ref[...] + b_ref[...].astype(jnp.float32)
        # dropout: identity in eval mode
        h = h + res_ref[...].astype(jnp.float32)

        # LayerNorm over the REAL (unpadded) feature width, one-pass stats.
        # Padded columns of h are exactly zero so they do not perturb sums.
        inv_d = 1.0 / d_real
        s1 = jnp.sum(h, axis=-1, keepdims=True)
        s2 = jnp.sum(h * h, axis=-1, keepdims=True)
        mean = s1 * inv_d
        var = jnp.maximum(s2 * inv_d - mean * mean, 0.0)
        normed = (h - mean) * lax.rsqrt(var + eps)
        out = (normed * gamma_ref[...].astype(jnp.float32)
               + beta_ref[...].astype(jnp.float32))
        o_ref[...] = out.astype(o_ref.dtype)


# ------------------------------ wrapper -------------------------------------

def _round_up(x, m):
    return ((x + m - 1) // m) * m


def _pick_vmem_limit(tm, tk, doutp, x_bytes, w_bytes, r_bytes, o_bytes):
    est = (2 * tm * tk * x_bytes          # x tiles (double-buffered)
           + 2 * tk * doutp * w_bytes     # weight tiles (double-buffered)
           + 2 * tm * doutp * r_bytes     # residual tiles
           + 2 * tm * doutp * o_bytes     # output tiles
           + tm * doutp * 4               # f32 accumulator scratch
           + 6 * doutp * 4)               # bias / gamma / beta
    est = int(est * 1.5) + (2 << 20)      # headroom for compiler scratch
    # cap at v7x physical VMEM, never below a sane floor
    return max(min(est, 64 * 1024 * 1024), 16 * 1024 * 1024)


def ffn_forward(params, hidden_states, input_tensor, *, eps=1e-5,
                block_rows=512, block_k=2048, matmul_dtype=jnp.bfloat16):
    """Fused FFN forward.

    hidden_states: (..., Din)
    input_tensor:  (..., Dout)
    returns:       (..., Dout) = LayerNorm(Linear(hidden_states) + input_tensor)
    """
    w = params["dense_weight"]        # (Dout, Din)  PyTorch nn.Linear layout
    b = params["dense_bias"]          # (Dout,)
    gamma = params["ln_weight"]       # (Dout,)
    beta = params["ln_bias"]          # (Dout,)

    Din = hidden_states.shape[-1]
    Dout = w.shape[0]
    out_shape = input_tensor.shape
    out_dtype = input_tensor.dtype

    # One-time XLA-side transpose + cast: W^T is (Din, Dout), lane-major N.
    wt = w.T.astype(matmul_dtype)

    x2d = hidden_states.reshape(-1, Din).astype(matmul_dtype)
    r2d = input_tensor.reshape(-1, Dout)
    M = x2d.shape[0]

    # Lane-dense padding of feature dims (multiples of 128).
    Dinp = _round_up(Din, 128)
    Doutp = _round_up(Dout, 128)

    # Row tile: multiple of 16 (bf16 sublane packing), capped by block_rows.
    tm = min(block_rows, _round_up(M, 16))
    tm = _round_up(tm, 16)
    Mp = _round_up(M, tm)

    # K tile: whole (padded) Din if it fits, otherwise capped so the
    # double-buffered weight tile stays well inside v7x's 64 MiB VMEM.
    w_itemsize = jnp.dtype(matmul_dtype).itemsize
    tk_cap = max(128, ((12 * 1024 * 1024) // (Doutp * w_itemsize)) // 128 * 128)
    tk = min(Dinp, block_k, tk_cap)
    if Dinp % tk:
        Dinp = _round_up(Dinp, tk)

    # Zero-padding (no-ops when already aligned).
    x2d = jnp.pad(x2d, ((0, Mp - M), (0, Dinp - Din)))
    wt = jnp.pad(wt, ((0, Dinp - Din), (0, Doutp - Dout)))
    r2d = jnp.pad(r2d, ((0, Mp - M), (0, Doutp - Dout)))
    b2 = jnp.pad(b.reshape(1, Dout), ((0, 0), (0, Doutp - Dout)))
    gamma2 = jnp.pad(gamma.reshape(1, Dout), ((0, 0), (0, Doutp - Dout)))
    beta2 = jnp.pad(beta.reshape(1, Dout), ((0, 0), (0, Doutp - Dout)))

    grid = (Mp // tm, Dinp // tk)

    x_bytes = jnp.dtype(matmul_dtype).itemsize
    r_bytes = jnp.dtype(r2d.dtype).itemsize
    o_bytes = jnp.dtype(out_dtype).itemsize
    vmem_limit = _pick_vmem_limit(tm, tk, Doutp, x_bytes, w_itemsize,
                                  r_bytes, o_bytes)
    cost = pl.CostEstimate(
        flops=2 * Mp * Dinp * Doutp,
        transcendentals=0,
        bytes_accessed=(Mp * Dinp * x_bytes
                        + (Mp // tm) * Dinp * Doutp * w_itemsize
                        + Mp * Doutp * (r_bytes + o_bytes)),
    )

    kern = functools.partial(_ffn_kernel, eps=eps, d_real=float(Dout))

    out2d = pl.pallas_call(
        kern,
        out_shape=jax.ShapeDtypeStruct((Mp, Doutp), out_dtype),
        grid_spec=pltpu.PrefetchScalarGridSpec(
            num_scalar_prefetch=0,
            grid=grid,
            in_specs=[
                pl.BlockSpec((tm, tk), lambda i, k: (i, k)),      # x rows
                pl.BlockSpec((tk, Doutp), lambda i, k: (k, 0)),   # W^T tile
                pl.BlockSpec((1, Doutp), lambda i, k: (0, 0)),    # bias
                pl.BlockSpec((tm, Doutp), lambda i, k: (i, 0)),   # residual
                pl.BlockSpec((1, Doutp), lambda i, k: (0, 0)),    # LN gamma
                pl.BlockSpec((1, Doutp), lambda i, k: (0, 0)),    # LN beta
            ],
            out_specs=pl.BlockSpec((tm, Doutp), lambda i, k: (i, 0)),
            scratch_shapes=[pltpu.VMEM((tm, Doutp), jnp.float32)],
        ),
        compiler_params=pltpu.CompilerParams(
            dimension_semantics=("parallel", "arbitrary"),
            vmem_limit_bytes=vmem_limit,
        ),
        cost_estimate=cost,
    )(x2d, wt, b2, r2d, gamma2, beta2)

    out2d = out2d[:M, :Dout]
    return out2d.reshape(out_shape)


# ------------------------------ reference -----------------------------------

def ffn_reference(params, hidden_states, input_tensor, eps=1e-5):
    h = hidden_states @ params["dense_weight"].T + params["dense_bias"]
    h = h + input_tensor
    mean = jnp.mean(h, axis=-1, keepdims=True)
    var = jnp.mean((h - mean) ** 2, axis=-1, keepdims=True)
    normed = (h - mean) / jnp.sqrt(var + eps)
    return normed * params["ln_weight"] + params["ln_bias"]


# -------------------------------- main ---------------------------------------

if __name__ == "__main__":
    B, L = 2, 8            # batch, seq
    Din, Dout = 48, 32     # dim_in, dim_out

    key = jax.random.PRNGKey(0)
    k1, k2, k3, k4, k5, k6 = jax.random.split(key, 6)

    params = {
        "dense_weight": jax.random.normal(k1, (Dout, Din), jnp.float32) * 0.05,
        "dense_bias":   jax.random.normal(k2, (Dout,), jnp.float32) * 0.05,
        "ln_weight":    jnp.ones((Dout,), jnp.float32)
                        + jax.random.normal(k3, (Dout,), jnp.float32) * 0.01,
        "ln_bias":      jax.random.normal(k4, (Dout,), jnp.float32) * 0.01,
    }

    hidden_states = jax.random.normal(k5, (B, L, Din), jnp.float32)
    input_tensor = jax.random.normal(k6, (B, L, Dout), jnp.float32)

    ref = ffn_reference(params, hidden_states, input_tensor)

    # f32-matmul path: bit-level check of the fused dense+residual+LN math.
    out_f32 = ffn_forward(params, hidden_states, input_tensor,
                          matmul_dtype=jnp.float32)
    out_f32 = jax.block_until_ready(out_f32)
    assert out_f32.shape == (B, L, Dout)
    assert jnp.allclose(out_f32, ref, atol=1e-5, rtol=1e-5), (
        float(jnp.max(jnp.abs(out_f32 - ref))))

    # bf16-MXU fast path (default): same kernel, looser tolerance.
    out_bf16 = jax.block_until_ready(
        ffn_forward(params, hidden_states, input_tensor))
    assert out_bf16.shape == (B, L, Dout)
    assert jnp.allclose(out_bf16, ref, atol=2e-2, rtol=2e-2), (
        float(jnp.max(jnp.abs(out_bf16 - ref))))

    print("KERNEL_OK")
</pallas_src>

<mosaic_0001>
module attributes {stable_mosaic.version = 11 : i64} {
  func.func @_ffn_kernel(%arg0: i32, %arg1: i32, %arg2: memref<16x128xf32, #tpu.memory_space<vmem>>, %arg3: memref<128x128xf32, #tpu.memory_space<vmem>>, %arg4: memref<1x128xf32, #tpu.memory_space<vmem>>, %arg5: memref<16x128xf32, #tpu.memory_space<vmem>>, %arg6: memref<1x128xf32, #tpu.memory_space<vmem>>, %arg7: memref<1x128xf32, #tpu.memory_space<vmem>>, %arg8: memref<16x128xf32, #tpu.memory_space<vmem>>, %arg9: memref<16x128xf32, #tpu.memory_space<vmem>>) attributes {dimension_semantics = [#tpu.dimension_semantics<parallel>, #tpu.dimension_semantics<arbitrary>], iteration_bounds = array<i64: 1, 1>, scalar_prefetch = 0 : i64, scratch_operands = 1 : i64, tpu.core_type = #tpu.core_type<tc>, window_params = [{transform_indices = @transform_0, window_bounds = array<i64: 16, 128>}, {transform_indices = @transform_1, window_bounds = array<i64: 128, 128>}, {pipeline_mode = #tpu.pipeline_mode<synchronous>, transform_indices = @transform_2, window_bounds = array<i64: 1, 128>}, {transform_indices = @transform_3, window_bounds = array<i64: 16, 128>}, {pipeline_mode = #tpu.pipeline_mode<synchronous>, transform_indices = @transform_4, window_bounds = array<i64: 1, 128>}, {pipeline_mode = #tpu.pipeline_mode<synchronous>, transform_indices = @transform_5, window_bounds = array<i64: 1, 128>}, {transform_indices = @transform_6, window_bounds = array<i64: 16, 128>}]} {
    %c0_i32 = arith.constant 0 : i32
    %0 = arith.cmpi eq, %arg1, %c0_i32 : i32
    %1 = arith.extui %0 : i1 to i32
    %c0_i32_0 = arith.constant 0 : i32
    %2 = arith.cmpi ne, %1, %c0_i32_0 : i32
    scf.if %2 {
      %cst_10 = arith.constant 0.000000e+00 : f32
      %12 = vector.broadcast %cst_10 : f32 to vector<16x128xf32>
      %c0_11 = arith.constant 0 : index
      %c0_12 = arith.constant 0 : index
      %13 = vector.load %arg9[%c0_11, %c0_12] : memref<16x128xf32, #tpu.memory_space<vmem>>, vector<16x128xf32>
      tpu.vector_store %arg9[%c0_11, %c0_12], %12 {strides = array<i32>} : memref<16x128xf32, #tpu.memory_space<vmem>>, vector<16x128xf32>,
    } else {
    }
    %c0 = arith.constant 0 : index
    %c0_1 = arith.constant 0 : index
    %3 = vector.load %arg9[%c0, %c0_1] : memref<16x128xf32, #tpu.memory_space<vmem>>, vector<16x128xf32>
    %c0_2 = arith.constant 0 : index
    %c0_3 = arith.constant 0 : index
    %4 = vector.load %arg2[%c0_2, %c0_3] : memref<16x128xf32, #tpu.memory_space<vmem>>, vector<16x128xf32>
    %c0_4 = arith.constant 0 : index
    %c0_5 = arith.constant 0 : index
    %5 = vector.load %arg3[%c0_4, %c0_5] : memref<128x128xf32, #tpu.memory_space<vmem>>, vector<128x128xf32>
    %cst = arith.constant dense<0.000000e+00> : vector<16x128xf32>
    %6 = tpu.matmul %4, %5, %cst {dimension_numbers = #tpu.dot_dimension_numbers<[1], [0], [0], [1], [0, 0, 1, 1], [], []>} : vector<16x128xf32>, vector<128x128xf32>, vector<16x128xf32> -> vector<16x128xf32>
    %7 = arith.addf %3, %6 : vector<16x128xf32>
    %c0_6 = arith.constant 0 : index
    %c0_7 = arith.constant 0 : index
    %8 = vector.load %arg9[%c0_6, %c0_7] : memref<16x128xf32, #tpu.memory_space<vmem>>, vector<16x128xf32>
    tpu.vector_store %arg9[%c0_6, %c0_7], %7 {strides = array<i32>} : memref<16x128xf32, #tpu.memory_space<vmem>>, vector<16x128xf32>,
    %c0_i32_8 = arith.constant 0 : i32
    %9 = arith.cmpi eq, %arg1, %c0_i32_8 : i32
    %10 = arith.extui %9 : i1 to i32
    %c0_i32_9 = arith.constant 0 : i32
    %11 = arith.cmpi ne, %10, %c0_i32_9 : i32
    scf.if %11 {
      %c0_10 = arith.constant 0 : index
      %c0_11 = arith.constant 0 : index
      %12 = vector.load %arg9[%c0_10, %c0_11] : memref<16x128xf32, #tpu.memory_space<vmem>>, vector<16x128xf32>
      %c0_12 = arith.constant 0 : index
      %c0_13 = arith.constant 0 : index
      %13 = vector.load %arg4[%c0_12, %c0_13] : memref<1x128xf32, #tpu.memory_space<vmem>>, vector<1x128xf32>
      %14 = vector.broadcast %13 : vector<1x128xf32> to vector<16x128xf32>
      %15 = arith.addf %12, %14 : vector<16x128xf32>
      %c0_14 = arith.constant 0 : index
      %c0_15 = arith.constant 0 : index
      %16 = vector.load %arg5[%c0_14, %c0_15] : memref<16x128xf32, #tpu.memory_space<vmem>>, vector<16x128xf32>
      %17 = arith.addf %15, %16 : vector<16x128xf32>
      %cst_16 = arith.constant dense<0.000000e+00> : vector<16xf32>
      %18 = vector.multi_reduction <add>, %17, %cst_16 [1] : vector<16x128xf32> to vector<16xf32>
      %19 = vector.shape_cast %18 : vector<16xf32> to vector<16x1xf32>
      %20 = arith.mulf %17, %17 : vector<16x128xf32>
      %cst_17 = arith.constant dense<0.000000e+00> : vector<16xf32>
      %21 = vector.multi_reduction <add>, %20, %cst_17 [1] : vector<16x128xf32> to vector<16xf32>
      %22 = vector.shape_cast %21 : vector<16xf32> to vector<16x1xf32>
      %cst_18 = arith.constant 3.125000e-02 : f32
      %23 = vector.broadcast %cst_18 : f32 to vector<16x1xf32>
      %24 = arith.mulf %19, %23 : vector<16x1xf32>
      %cst_19 = arith.constant 3.125000e-02 : f32
      %25 = vector.broadcast %cst_19 : f32 to vector<16x1xf32>
      %26 = arith.mulf %22, %25 : vector<16x1xf32>
      %27 = arith.mulf %24, %24 : vector<16x1xf32>
      %28 = arith.subf %26, %27 : vector<16x1xf32>
      %cst_20 = arith.constant 0.000000e+00 : f32
      %29 = vector.broadcast %cst_20 : f32 to vector<16x1xf32>
      %30 = arith.maximumf %28, %29 : vector<16x1xf32>
      %31 = vector.broadcast %24 : vector<16x1xf32> to vector<16x128xf32>
      %32 = arith.subf %17, %31 : vector<16x128xf32>
      %cst_21 = arith.constant 9.99999974E-6 : f32
      %33 = vector.broadcast %cst_21 : f32 to vector<16x1xf32>
      %34 = arith.addf %30, %33 : vector<16x1xf32>
      %35 = math.rsqrt %34 : vector<16x1xf32>
      %36 = vector.broadcast %35 : vector<16x1xf32> to vector<16x128xf32>
      %37 = arith.mulf %32, %36 : vector<16x128xf32>
      %c0_22 = arith.constant 0 : index
      %c0_23 = arith.constant 0 : index
      %38 = vector.load %arg6[%c0_22, %c0_23] : memref<1x128xf32, #tpu.memory_space<vmem>>, vector<1x128xf32>
      %39 = vector.broadcast %38 : vector<1x128xf32> to vector<16x128xf32>
      %40 = arith.mulf %37, %39 : vector<16x128xf32>
      %c0_24 = arith.constant 0 : index
      %c0_25 = arith.constant 0 : index
      %41 = vector.load %arg7[%c0_24, %c0_25] : memref<1x128xf32, #tpu.memory_space<vmem>>, vector<1x128xf32>
      %42 = vector.broadcast %41 : vector<1x128xf32> to vector<16x128xf32>
      %43 = arith.addf %40, %42 : vector<16x128xf32>
      %c0_26 = arith.constant 0 : index
      %c0_27 = arith.constant 0 : index
      %44 = vector.load %arg8[%c0_26, %c0_27] : memref<16x128xf32, #tpu.memory_space<vmem>>, vector<16x128xf32>
      tpu.vector_store %arg8[%c0_26, %c0_27], %43 {strides = array<i32>} : memref<16x128xf32, #tpu.memory_space<vmem>>, vector<16x128xf32>,
    } else {
    }
    return
  }
  func.func @transform_0(%arg0: i32, %arg1: i32) -> (i32, i32) {
    %c0_i32 = arith.constant 0 : i32
    return %arg0, %arg1 : i32, i32
  }
  func.func @transform_1(%arg0: i32, %arg1: i32) -> (i32, i32) {
    %c0_i32 = arith.constant 0 : i32
    %c0_i32_0 = arith.constant 0 : i32
    return %arg1, %c0_i32 : i32, i32
  }
  func.func @transform_2(%arg0: i32, %arg1: i32) -> (i32, i32) {
    %c0_i32 = arith.constant 0 : i32
    %c0_i32_0 = arith.constant 0 : i32
    %c0_i32_1 = arith.constant 0 : i32
    return %c0_i32, %c0_i32_0 : i32, i32
  }
  func.func @transform_3(%arg0: i32, %arg1: i32) -> (i32, i32) {
    %c0_i32 = arith.constant 0 : i32
    %c0_i32_0 = arith.constant 0 : i32
    return %arg0, %c0_i32 : i32, i32
  }
  func.func @transform_4(%arg0: i32, %arg1: i32) -> (i32, i32) {
    %c0_i32 = arith.constant 0 : i32
    %c0_i32_0 = arith.constant 0 : i32
    %c0_i32_1 = arith.constant 0 : i32
    return %c0_i32, %c0_i32_0 : i32, i32
  }
  func.func @transform_5(%arg0: i32, %arg1: i32) -> (i32, i32) {
    %c0_i32 = arith.constant 0 : i32
    %c0_i32_0 = arith.constant 0 : i32
    %c0_i32_1 = arith.constant 0 : i32
    return %c0_i32, %c0_i32_0 : i32, i32
  }
  func.func @transform_6(%arg0: i32, %arg1: i32) -> (i32, i32) {
    %c0_i32 = arith.constant 0 : i32
    %c0_i32_0 = arith.constant 0 : i32
    return %arg0, %c0_i32 : i32, i32
  }
}

</mosaic_0001>

<llo_original>
// kernel: tpu_custom_call.1
$region0: #{tpu_custom_call.1}
  #allocation0 [shape = 'u32[]', space=smem, size = 0x4, offset = 0x4, fixed_abs, tag = 'smem constant byte address 0x4 - core index']
  #allocation1 [shape = 'u32[144,128]{1,0:T(1,128)}', space=vmem, size = 0x12000, scoped, tag = 'internal scratch']
  #allocation2 [shape = 'f32[16,128]{1,0:T(8,128)}', space=vmem, size = 0x2000, scoped, tag = 'scratch operand']
  %s0 = inlined_call_operand.hbm [shape: f32[16,128], index: 0, kind: input, shape index: {}]
  %s1 = inlined_call_operand.hbm [shape: f32[128,128], index: 1, kind: input, shape index: {}]
  %s2 = inlined_call_operand.vmem [shape: f32[1,128], index: 2, kind: input, shape index: {}]
  %s3 = inlined_call_operand.hbm [shape: f32[16,128], index: 3, kind: input, shape index: {}]
  %s4 = inlined_call_operand.vmem [shape: f32[1,128], index: 4, kind: input, shape index: {}]
  %s5 = inlined_call_operand.vmem [shape: f32[1,128], index: 5, kind: input, shape index: {}]
  %s6 = inlined_call_operand.hbm [shape: f32[16,128], index: 6, kind: output, shape index: {}]
  %s7 = sld [smem:[#allocation0]]
  $region54: #{tpu_custom_call.1} parent=0
    _
  %s9 = ssub.s32 1, %s7
  %s10 = scalar_select 0, %s9, %s7
  $region1: #{tpu_custom_call.1} parent=0
    #allocation3 [shape = 'u8[8192]{0}', space=vmem, size = 0x2000, scoped, tag = 'input window, operand 0, single buffered']
    #allocation4 [shape = 's32[1]{0}', space=sflag, size = 0x4, scoped, tag = 'scoped memory for tpu_custom_call.1']
    #allocation5 [shape = 's32[1]{0}', space=sflag, size = 0x4, scoped, tag = 'scoped memory for tpu_custom_call.1']
    #allocation6 [shape = 'u8[65536]{0}', space=vmem, size = 0x10000, scoped, tag = 'input window, operand 1, single buffered']
    #allocation7 [shape = 's32[1]{0}', space=sflag, size = 0x4, scoped, tag = 'scoped memory for tpu_custom_call.1']
    #allocation8 [shape = 'u8[8192]{0}', space=vmem, size = 0x2000, scoped, tag = 'input window, operand 3, single buffered']
    #allocation9 [shape = 'u8[8192]{0}', space=vmem, size = 0x2000, scoped, tag = 'output window, operand 0, single buffered']
    %11 = vsyncpa [#allocation4], 0
    %12 = vsyncpa [#allocation7], 0
    %13 = vsyncpa [#allocation5], 0
    // Predicated region
    $region2: #{tpu_custom_call.1} parent=1 // pred_check
      _
    $region3: #{tpu_custom_call.1} parent=1 // pred_check_branch
      %15 = sbr.rel (0) target = $region5
    $region4: #{tpu_custom_call.1} parent=1 // pred_region
      %s17 = ssub.s32 256, 256
      %18 = vsyncadd [#allocation4], %s17
      %s19 = sshll.u32 [#allocation3], 4
      %s20 = int_to_ptr.vmem [resolvable:$true] %s19
      %25 = dma.hbm_to_vmem [thread:$0]  %s0, 256, %s20, [#allocation4], 128, 128, 8
    $region5: #{tpu_custom_call.1} parent=1 // pred_fallthru
      _
    // Predicated region
    $region6: #{tpu_custom_call.1} parent=1 // pred_check
      _
    $region7: #{tpu_custom_call.1} parent=1 // pred_check_branch
      %27 = sbr.rel (0) target = $region9
    $region8: #{tpu_custom_call.1} parent=1 // pred_region
      %s29 = ssub.s32 2048, 2048
      %30 = vsyncadd [#allocation7], %s29
      %s31 = sshll.u32 [#allocation6], 4
      %s32 = int_to_ptr.vmem [resolvable:$true] %s31
      %37 = dma.hbm_to_vmem [thread:$0]  %s1, 2048, %s32, [#allocation7], 128, 128, 8
    $region9: #{tpu_custom_call.1} parent=1 // pred_fallthru
      _
    // Predicated region
    $region10: #{tpu_custom_call.1} parent=1 // pred_check
      _
    $region11: #{tpu_custom_call.1} parent=1 // pred_check_branch
      %39 = sbr.rel (0) target = $region13
    $region12: #{tpu_custom_call.1} parent=1 // pred_region
      _
    $region13: #{tpu_custom_call.1} parent=1 // pred_fallthru
      _
    // Predicated region
    $region14: #{tpu_custom_call.1} parent=1 // pred_check
      _
    $region15: #{tpu_custom_call.1} parent=1 // pred_check_branch
      %41 = sbr.rel (0) target = $region17
    $region16: #{tpu_custom_call.1} parent=1 // pred_region
      %s43 = ssub.s32 256, 256
      %44 = vsyncadd [#allocation7], %s43
      %s45 = sshll.u32 [#allocation8], 4
      %s46 = int_to_ptr.vmem [resolvable:$true] %s45
      %51 = dma.hbm_to_vmem [thread:$0]  %s3, 256, %s46, [#allocation7], 128, 128, 8
    $region17: #{tpu_custom_call.1} parent=1 // pred_fallthru
      _
    // Predicated region
    $region18: #{tpu_custom_call.1} parent=1 // pred_check
      _
    $region19: #{tpu_custom_call.1} parent=1 // pred_check_branch
      %53 = sbr.rel (0) target = $region21
    $region20: #{tpu_custom_call.1} parent=1 // pred_region
      _
    $region21: #{tpu_custom_call.1} parent=1 // pred_fallthru
      _
    // Predicated region
    $region22: #{tpu_custom_call.1} parent=1 // pred_check
      _
    $region23: #{tpu_custom_call.1} parent=1 // pred_check_branch
      %55 = sbr.rel (0) target = $region25
    $region24: #{tpu_custom_call.1} parent=1 // pred_region
      _
    $region25: #{tpu_custom_call.1} parent=1 // pred_fallthru
      _
    // Predicated region
    $region26: #{tpu_custom_call.1} parent=1 // pred_check
      _
    $region27: #{tpu_custom_call.1} parent=1 // pred_check_branch
      %57 = sbr.rel (0) target = $region29
    $region28: #{tpu_custom_call.1} parent=1 // pred_region
      %58 = dma.done [#allocation4], 256
    $region29: #{tpu_custom_call.1} parent=1 // pred_fallthru
      _
    // Predicated region
    $region30: #{tpu_custom_call.1} parent=1 // pred_check
      _
    $region31: #{tpu_custom_call.1} parent=1 // pred_check_branch
      %60 = sbr.rel (0) target = $region33
    $region32: #{tpu_custom_call.1} parent=1 // pred_region
      %61 = dma.done [#allocation7], 2048
    $region33: #{tpu_custom_call.1} parent=1 // pred_fallthru
      _
    // Predicated region
    $region34: #{tpu_custom_call.1} parent=1 // pred_check
      _
    $region35: #{tpu_custom_call.1} parent=1 // pred_check_branch
      %63 = sbr.rel (0) target = $region37
    $region36: #{tpu_custom_call.1} parent=1 // pred_region
      %64 = dma.done [#allocation7], 256
    $region37: #{tpu_custom_call.1} parent=1 // pred_fallthru
      _
    %p65 = scmp.eq.s32.totalorder 0, 0
    // Predicated region
    $region38: #{tpu_custom_call.1} parent=1 // pred_check
      %p66 = pneg %p65
    $region39: #{tpu_custom_call.1} parent=1 // pred_check_branch
      %68 = sbr.rel (%p66) target = $region41
    $region40: #{tpu_custom_call.1} parent=1 // pred_region
      %69 = vst [vmem:[#allocation2] sm:$0xff] 0.0
      %70 = vst [vmem:[#allocation2 + $0x8] sm:$0xff] 0.0
    $region41: #{tpu_custom_call.1} parent=1 // pred_fallthru
      _
    %v71 = vld [vmem:[#allocation2] sm:$0xff]
    %v72 = vld [vmem:[#allocation2 + $0x8] sm:$0xff]
    %v73 = vld [vmem:[#allocation3] sm:$0xff]
    %v74 = vld [vmem:[#allocation3 + $0x8] sm:$0xff]
    %v75 = vld [vmem:[#allocation6] sm:$0xff]
    %v76 = vld [vmem:[#allocation6 + $0x8] sm:$0xff]
    %v77 = vld [vmem:[#allocation6 + $0x10] sm:$0xff]
    %v78 = vld [vmem:[#allocation6 + $0x18] sm:$0xff]
    %v79 = vld [vmem:[#allocation6 + $0x20] sm:$0xff]
    %v80 = vld [vmem:[#allocation6 + $0x28] sm:$0xff]
    %v81 = vld [vmem:[#allocation6 + $0x30] sm:$0xff]
    %v82 = vld [vmem:[#allocation6 + $0x38] sm:$0xff]
    %v83 = vld [vmem:[#allocation6 + $0x40] sm:$0xff]
    %v84 = vld [vmem:[#allocation6 + $0x48] sm:$0xff]
    %v85 = vld [vmem:[#allocation6 + $0x50] sm:$0xff]
    %v86 = vld [vmem:[#allocation6 + $0x58] sm:$0xff]
    %v87 = vld [vmem:[#allocation6 + $0x60] sm:$0xff]
    %v88 = vld [vmem:[#allocation6 + $0x68] sm:$0xff]
    %v89 = vld [vmem:[#allocation6 + $0x70] sm:$0xff]
    %v90 = vld [vmem:[#allocation6 + $0x78] sm:$0xff]
    %91 = vmatprep.subr.mxu0 0.0
    %92 = vmatpush1.msra.mxu0 %v75
    %93 = vmatprep.subr.mxu0 0.0
    %94 = vmatpush1.msra.mxu0 %v76
    %95 = vmatprep.subr.mxu0 0.0
    %96 = vmatpush1.msra.mxu0 %v77
    %97 = vmatprep.subr.mxu0 0.0
    %98 = vmatpush1.msra.mxu0 %v78
    %99 = vmatprep.subr.mxu0 0.0
    %100 = vmatpush1.msra.mxu0 %v79
    %101 = vmatprep.subr.mxu0 0.0
    %102 = vmatpush1.msra.mxu0 %v80
    %103 = vmatprep.subr.mxu0 0.0
    %104 = vmatpush1.msra.mxu0 %v81
    %105 = vmatprep.subr.mxu0 0.0
    %106 = vmatpush1.msra.mxu0 %v82
    %107 = vmatprep.subr.mxu0 0.0
    %108 = vmatpush1.msra.mxu0 %v83
    %109 = vmatprep.subr.mxu0 0.0
    %110 = vmatpush1.msra.mxu0 %v84
    %111 = vmatprep.subr.mxu0 0.0
    %112 = vmatpush1.msra.mxu0 %v85
    %113 = vmatprep.subr.mxu0 0.0
    %114 = vmatpush1.msra.mxu0 %v86
    %115 = vmatprep.subr.mxu0 0.0
    %116 = vmatpush1.msra.mxu0 %v87
    %117 = vmatprep.subr.mxu0 0.0
    %118 = vmatpush1.msra.mxu0 %v88
    %119 = vmatprep.subr.mxu0 0.0
    %120 = vmatpush1.msra.mxu0 %v89
    %121 = vmatprep.subr.mxu0 0.0
    %122 = vmatpush1.msra.mxu0 %v90
    %123 = vmatprep.subr.mxu0 0.0
    %124 = vmatpush1.msra.mxu0 0.0
    %125 = vmatprep.subr.mxu0 0.0
    %126 = vmatpush1.msra.mxu0 0.0
    %127 = vmatprep.subr.mxu0 0.0
    %128 = vmatpush1.msra.mxu0 0.0
    %129 = vmatprep.subr.mxu0 0.0
    %130 = vmatpush1.msra.mxu0 0.0
    %131 = vmatprep.subr.mxu0 0.0
    %132 = vmatpush1.msra.mxu0 0.0
    %133 = vmatprep.subr.mxu0 0.0
    %134 = vmatpush1.msra.mxu0 0.0
    %135 = vmatprep.subr.mxu0 0.0
    %136 = vmatpush1.msra.mxu0 0.0
    %137 = vmatprep.subr.mxu0 0.0
    %138 = vmatpush1.msra.mxu0 0.0
    %139 = vmatprep.subr.mxu0 0.0
    %140 = vmatpush1.msra.mxu0 0.0
    %141 = vmatprep.subr.mxu0 0.0
    %142 = vmatpush1.msra.mxu0 0.0
    %143 = vmatprep.subr.mxu0 0.0
    %144 = vmatpush1.msra.mxu0 0.0
    %145 = vmatprep.subr.mxu0 0.0
    %146 = vmatpush1.msra.mxu0 0.0
    %147 = vmatprep.subr.mxu0 0.0
    %148 = vmatpush1.msra.mxu0 0.0
    %149 = vmatprep.subr.mxu0 0.0
    %150 = vmatpush1.msra.mxu0 0.0
    %151 = vmatprep.subr.mxu0 0.0
    %152 = vmatpush1.msra.mxu0 0.0
    %153 = vmatprep.subr.mxu0 0.0
    %154 = vmatpush1.msra.mxu0 0.0
    %155 = vmatprep.mubr.f32.mxu0 0.0
    %156 = vmatmul.mubr.f32.gmra.mrb[0].mxu0 %v73
    %v157 = vpop.f32.mrb[0].mxu0
    %v158 = vadd.f32 0.0, %v157
    %v159 = vpop.f32.mrb[0].mxu0
    %160 = vmatprep.mubr.f32.mxu0 0.0
    %161 = vmatmul.mubr.f32.gmra.mrb[0].mxu0 %v74
    %v162 = vpop.f32.mrb[0].mxu0
    %v163 = vadd.f32 0.0, %v162
    %v164 = vpop.f32.mrb[0].mxu0
    %165 = vdwg.mxu0
    %v166 = vadd.f32 %v71, %v158
    %v167 = vadd.f32 %v72, %v163
    %168 = vst [vmem:[#allocation2] sm:$0xff] %v166
    %169 = vst [vmem:[#allocation2 + $0x8] sm:$0xff] %v167
    // Predicated region
    $region42: #{tpu_custom_call.1} parent=1 // pred_check
      %p170 = pneg %p65
    $region43: #{tpu_custom_call.1} parent=1 // pred_check_branch
      %172 = sbr.rel (%p170) target = $region45
    $region44: #{tpu_custom_call.1} parent=1 // pred_region
      %v173 = vld [vmem:[#allocation2] sm:$0xff]
      %v174 = vld [vmem:[#allocation2 + $0x8] sm:$0xff]
      %v175 = vld [vmem:[%s2] sm:$0x1]
      %v177 = vlaneseq
      %v178 = vshrl.u32 %v177, 7
      %v179 = vsub.s32 0, %v178
      %v180 = vrot.slane %v175, %v179
      %v182 = vadd.f32 %v173, %v180
      %v183 = vadd.f32 %v174, %v180
      %v184 = vld [vmem:[#allocation8] sm:$0xff]
      %v185 = vld [vmem:[#allocation8 + $0x8] sm:$0xff]
      %v186 = vadd.f32 %v182, %v184
      %v187 = vadd.f32 %v183, %v185
      %188 = vadd.xlane.f32.xlu0 %v186
      %v189 = vpop.xlane.xlu0 %188
      %190 = vadd.xlane.f32.xlu0 %v187
      %v191 = vpop.xlane.xlu0 %190
      %v192 = vmul.f32 %v186, %v186
      %v193 = vmul.f32 %v187, %v187
      %194 = vadd.xlane.f32.xlu0 %v192
      %v195 = vpop.xlane.xlu0 %194
      %196 = vadd.xlane.f32.xlu0 %v193
      %v197 = vpop.xlane.xlu0 %196
      %v198 = vmul.f32 %v189, 0.03125
      %v199 = vmul.f32 %v191, 0.03125
      %v200 = vmul.f32 %v195, 0.03125
      %v201 = vmul.f32 %v197, 0.03125
      %v202 = vmul.f32 %v198, %v198
      %v203 = vmul.f32 %v199, %v199
      %v204 = vsub.f32 %v200, %v202
      %v205 = vsub.f32 %v201, %v203
      %v206 = vmax.f32 %v204, 0.0
      %v207 = vmax.f32 %v205, 0.0
      %v208 = vsub.f32 %v186, %v198
      %v209 = vsub.f32 %v187, %v199
      %v210 = vadd.f32 %v206, 1e-05
      %v211 = vadd.f32 %v207, 1e-05
      %v212 = vrsqrt.pop %v210
      %v213 = vrsqrt.pop %v211
      %v214 = vmul.f32 %v208, %v212
      %v215 = vmul.f32 %v209, %v213
      %v216 = vld [vmem:[%s4] sm:$0x1]
      %v218 = vlaneseq
      %v219 = vshrl.u32 %v218, 7
      %v220 = vsub.s32 0, %v219
      %v221 = vrot.slane %v216, %v220
      %v223 = vmul.f32 %v214, %v221
      %v224 = vmul.f32 %v215, %v221
      %v225 = vld [vmem:[%s5] sm:$0x1]
      %v227 = vlaneseq
      %v228 = vshrl.u32 %v227, 7
      %v229 = vsub.s32 0, %v228
      %v230 = vrot.slane %v225, %v229
      %v232 = vadd.f32 %v223, %v230
      %v233 = vadd.f32 %v224, %v230
      %234 = vst [vmem:[#allocation9] sm:$0xff] %v232
      %235 = vst [vmem:[#allocation9 + $0x8] sm:$0xff] %v233
    $region45: #{tpu_custom_call.1} parent=1 // pred_fallthru
      _
    // Predicated region
    $region46: #{tpu_custom_call.1} parent=1 // pred_check
      _
    $region47: #{tpu_custom_call.1} parent=1 // pred_check_branch
      %237 = sbr.rel (0) target = $region49
    $region48: #{tpu_custom_call.1} parent=1 // pred_region
      %s239 = ssub.s32 256, 256
      %240 = vsyncadd [#allocation5], %s239
      %s241 = sshll.u32 [#allocation9], 4
      %s242 = int_to_ptr.vmem [resolvable:$true] %s241
      %247 = dma.vmem_to_hbm [thread:$0]  %s242, 256, %s6, [#allocation5], 128, 128, 8
    $region49: #{tpu_custom_call.1} parent=1 // pred_fallthru
      _
    // Predicated region
    $region50: #{tpu_custom_call.1} parent=1 // pred_check
      _
    $region51: #{tpu_custom_call.1} parent=1 // pred_check_branch
      %249 = sbr.rel (0) target = $region53
    $region52: #{tpu_custom_call.1} parent=1 // pred_region
      %250 = dma.done [#allocation5], 256
    $region53: #{tpu_custom_call.1} parent=1 // pred_fallthru
      _
    %251 = vsyncpa [#allocation4], 1
    %252 = vsyncpa [#allocation7], 1
    %253 = vsyncpa [#allocation5], 1

</llo_original>
